<compile_context>
chip_gen: v7x
topology: tpu7x:2x2x1
jax: 0.10.0
libtpu: 0.0.40
codegen_flags: <defaults>
</compile_context>

<pallas_src>
import jax
import jax.numpy as jnp
from jax.experimental import pallas as pl
from jax.experimental.pallas import tpu as pltpu

LANE = 128                              # vreg lane width
_VMEM_LIMIT_BYTES = 32 * 1024 * 1024    # safe scoped limit on every TPU generation
_VMEM_BUDGET_BYTES = 24 * 1024 * 1024   # guard threshold (headroom under the limit)


def _round_up(n, m):
    return ((n + m - 1) // m) * m


def _pad2(a, rows, cols):
    return jnp.pad(a, ((0, rows - a.shape[0]), (0, cols - a.shape[1])))


# --------------------------------------------------------------------------- #
# Kernel
# --------------------------------------------------------------------------- #
def mlp_kernel(x_ref, w1_ref, b1_ref, w2_ref, b2_ref, w3_ref, b3_ref, o_ref):
    """One batch tile through fc1+relu, fc2+relu, out.

    x / weights are bf16 (native MXU inputs); every dot accumulates in f32;
    bias + ReLU run on the f32 accumulator; the final store is lane-dense f32.
    """
    # fc1 + relu.  K = true in_feats (small); cheaper than inflating x 32x in HBM.
    h1 = jnp.dot(x_ref[...], w1_ref[...], preferred_element_type=jnp.float32)
    h1 = jnp.maximum(h1 + b1_ref[...], 0.0)
    # fc2 + relu (cast the activation back to bf16 so the MXU sees bf16 x bf16).
    h2 = jnp.dot(h1.astype(jnp.bfloat16), w2_ref[...],
                 preferred_element_type=jnp.float32)
    h2 = jnp.maximum(h2 + b2_ref[...], 0.0)
    # out (no activation)
    o = jnp.dot(h2.astype(jnp.bfloat16), w3_ref[...],
                preferred_element_type=jnp.float32)
    o_ref[...] = (o + b3_ref[...]).astype(o_ref.dtype)
    # TODO(synk): for genuinely tiny production feature dims (<=16) a VPU-only
    # broadcast-MAC path would avoid the padded MXU entirely; not implemented.


# --------------------------------------------------------------------------- #
# One-time parameter preparation (padding + bf16 cast hoisted out of forward)
# --------------------------------------------------------------------------- #
def prepare_params(w1, b1, w2, b2, w3, b3):
    """Pad feature dims to the lane width and cast weights to bf16 -- ONCE.

    Call at init time and reuse the result for every forward call so the
    per-call wrapper does no parameter padding/casting (each jnp.pad is a full
    HBM round trip).  Weight layout: (fan_in, fan_out).  The fan_in of w1
    (= in_feats) is intentionally left unpadded: x streams at its true width.
    """
    in_feats, hidden1 = w1.shape
    hidden2 = w2.shape[1]
    out_feats = w3.shape[1]
    H1, H2, Fo = (_round_up(d, LANE) for d in (hidden1, hidden2, out_feats))

    w1p = _pad2(w1, in_feats, H1).astype(jnp.bfloat16)
    w2p = _pad2(w2, H1, H2).astype(jnp.bfloat16)
    w3p = _pad2(w3, H2, Fo).astype(jnp.bfloat16)
    # Biases stay f32: they are added to the f32 accumulator inside the kernel.
    b1p = _pad2(jnp.asarray(b1, jnp.float32).reshape(1, -1), 1, H1)
    b2p = _pad2(jnp.asarray(b2, jnp.float32).reshape(1, -1), 1, H2)
    b3p = _pad2(jnp.asarray(b3, jnp.float32).reshape(1, -1), 1, Fo)
    return (w1p, b1p, w2p, b2p, w3p, b3p), out_feats


def _estimate_vmem_bytes(tm, in_feats, H1, H2, Fo):
    # BlockSpec pipelining double-buffers every input/output block by default.
    tiles = (tm * in_feats * 2               # x tile (bf16)
             + in_feats * H1 * 2 + H1 * 4    # w1 (bf16) + b1 (f32)
             + H1 * H2 * 2 + H2 * 4          # w2 + b2
             + H2 * Fo * 2 + Fo * 4          # w3 + b3
             + tm * Fo * 4)                  # out tile (f32)
    intermediates = tm * (H1 + H2) * 4       # h1 / h2 f32 temporaries
    return 2 * tiles + intermediates


# --------------------------------------------------------------------------- #
# Forward wrapper
# --------------------------------------------------------------------------- #
def mlp_forward(x, params, *, out_feats=None, tm=128, trim_output=True):
    """Run the fused MLP.  `params` must come from prepare_params()."""
    w1p, b1p, w2p, b2p, w3p, b3p = params
    B, in_feats = x.shape
    if w1p.shape[0] != in_feats:
        raise ValueError("x feature dim does not match prepared w1")
    H1, H2, Fo = w1p.shape[1], w2p.shape[1], w3p.shape[1]
    if out_feats is None:
        out_feats = Fo

    Bp = _round_up(max(B, tm), tm)          # batch padded to whole row tiles

    vmem_est = _estimate_vmem_bytes(tm, in_feats, H1, H2, Fo)
    if vmem_est > _VMEM_BUDGET_BYTES:
        # TODO(synk): add a K/N-tiled fallback (grid over H1/H2/Fo with an f32
        # accumulator scratch) once resident weights exceed the scoped VMEM
        # limit (smallest on v7x: 64 MiB physical / 32 MiB scoped).
        raise ValueError(
            f"estimated VMEM use {vmem_est / 2**20:.1f} MiB exceeds the "
            f"{_VMEM_BUDGET_BYTES / 2**20:.0f} MiB budget; reduce tm or tile "
            "the hidden/output dims instead of keeping all weights resident")

    # x: cast to bf16 (native MXU input), pad only the batch dim; the feature
    # dim keeps its true width -> no 32x lane inflation in HBM.
    xp = x.astype(jnp.bfloat16)
    if Bp != B:
        xp = jnp.pad(xp, ((0, Bp - B), (0, 0)))

    grid = (Bp // tm,)

    flops = 2 * Bp * (in_feats * H1 + H1 * H2 + H2 * Fo)
    bytes_accessed = (2 * (Bp * in_feats + in_feats * H1 + H1 * H2 + H2 * Fo)
                      + 4 * (H1 + H2 + Fo + Bp * Fo))

    out_p = pl.pallas_call(
        mlp_kernel,
        out_shape=jax.ShapeDtypeStruct((Bp, Fo), jnp.float32),
        grid=grid,
        in_specs=[
            pl.BlockSpec((tm, in_feats), lambda i: (i, 0)),   # x: tiled over batch
            pl.BlockSpec((in_feats, H1), lambda i: (0, 0)),   # weights / biases:
            pl.BlockSpec((1, H1), lambda i: (0, 0)),          #   constant index map
            pl.BlockSpec((H1, H2), lambda i: (0, 0)),         #   -> DMA'd once,
            pl.BlockSpec((1, H2), lambda i: (0, 0)),          #   VMEM-resident
            pl.BlockSpec((H2, Fo), lambda i: (0, 0)),         #   across grid steps
            pl.BlockSpec((1, Fo), lambda i: (0, 0)),
        ],
        out_specs=pl.BlockSpec((tm, Fo), lambda i: (i, 0)),
        compiler_params=pltpu.CompilerParams(
            dimension_semantics=("parallel",),   # v7x: the 2 TCs split the batch
            vmem_limit_bytes=_VMEM_LIMIT_BYTES,
        ),
        cost_estimate=pl.CostEstimate(
            flops=flops, transcendentals=0, bytes_accessed=bytes_accessed),
    )(xp, w1p, b1p, w2p, b2p, w3p, b3p)

    if not trim_output:
        return out_p                       # padded (Bp, Fo) lane-dense result
    return out_p[:B, :out_feats]


def _init_linear(key, fan_in, fan_out):
    # Deterministic init mimicking torch's uniform(-1/sqrt(fan_in), 1/sqrt(fan_in)).
    kw, kb = jax.random.split(key)
    bound = 1.0 / jnp.sqrt(float(fan_in))
    w = jax.random.uniform(kw, (fan_in, fan_out), jnp.float32, -bound, bound)
    b = jax.random.uniform(kb, (1, fan_out), jnp.float32, -bound, bound)
    return w, b


if __name__ == "__main__":
    in_feats, out_feats, hidden1, hidden2 = 4, 3, 7, 7
    batch, tm = 512, 128   # 4 grid steps -> >= 2 pipelined steps per v7x TensorCore

    key = jax.random.PRNGKey(0)
    kx, k1, k2, k3 = jax.random.split(key, 4)

    x = jax.random.normal(kx, (batch, in_feats), jnp.float32)
    w1, b1 = _init_linear(k1, in_feats, hidden1)
    w2, b2 = _init_linear(k2, hidden1, hidden2)
    w3, b3 = _init_linear(k3, hidden2, out_feats)

    # One-time parameter prep (lane padding + bf16 cast), reused per call.
    params, _ = prepare_params(w1, b1, w2, b2, w3, b3)

    out = mlp_forward(x, params, out_feats=out_feats, tm=tm)
    out = jax.block_until_ready(out)
    assert out.shape == (batch, out_feats)

    # Tight check vs a reference using the same numerics (bf16 MXU inputs,
    # f32 accumulation, f32 bias + relu).
    bf = jnp.bfloat16
    h = jnp.maximum(jnp.dot(x.astype(bf), w1.astype(bf),
                            preferred_element_type=jnp.float32) + b1, 0.0)
    h = jnp.maximum(jnp.dot(h.astype(bf), w2.astype(bf),
                            preferred_element_type=jnp.float32) + b2, 0.0)
    ref_bf16 = jnp.dot(h.astype(bf), w3.astype(bf),
                       preferred_element_type=jnp.float32) + b3
    assert jnp.allclose(out, ref_bf16, atol=1e-4, rtol=1e-4), \
        "mismatch vs bf16-consistent reference"

    # Loose check vs the pure-f32 reference (bounds the bf16 cast error).
    ref_f32 = jnp.maximum(x @ w1 + b1, 0.0)
    ref_f32 = jnp.maximum(ref_f32 @ w2 + b2, 0.0)
    ref_f32 = ref_f32 @ w3 + b3
    assert jnp.allclose(out, ref_f32, atol=5e-2, rtol=5e-2), \
        "mismatch vs f32 reference"

    print("KERNEL_OK")
</pallas_src>

<mosaic_0001>
module attributes {stable_mosaic.version = 11 : i64} {
  func.func @mlp_kernel(%arg0: i32, %arg1: memref<128x4xbf16, #tpu.memory_space<vmem>>, %arg2: memref<4x128xbf16, #tpu.memory_space<vmem>>, %arg3: memref<1x128xf32, #tpu.memory_space<vmem>>, %arg4: memref<128x128xbf16, #tpu.memory_space<vmem>>, %arg5: memref<1x128xf32, #tpu.memory_space<vmem>>, %arg6: memref<128x128xbf16, #tpu.memory_space<vmem>>, %arg7: memref<1x128xf32, #tpu.memory_space<vmem>>, %arg8: memref<128x128xf32, #tpu.memory_space<vmem>>) attributes {dimension_semantics = [#tpu.dimension_semantics<parallel>], iteration_bounds = array<i64: 4>, scalar_prefetch = 0 : i64, scratch_operands = 0 : i64, tpu.core_type = #tpu.core_type<tc>, window_params = [{transform_indices = @transform_0, window_bounds = array<i64: 128, 4>}, {pipeline_mode = #tpu.pipeline_mode<synchronous>, transform_indices = @transform_1, window_bounds = array<i64: 4, 128>}, {pipeline_mode = #tpu.pipeline_mode<synchronous>, transform_indices = @transform_2, window_bounds = array<i64: 1, 128>}, {pipeline_mode = #tpu.pipeline_mode<synchronous>, transform_indices = @transform_3, window_bounds = array<i64: 128, 128>}, {pipeline_mode = #tpu.pipeline_mode<synchronous>, transform_indices = @transform_4, window_bounds = array<i64: 1, 128>}, {pipeline_mode = #tpu.pipeline_mode<synchronous>, transform_indices = @transform_5, window_bounds = array<i64: 128, 128>}, {pipeline_mode = #tpu.pipeline_mode<synchronous>, transform_indices = @transform_6, window_bounds = array<i64: 1, 128>}, {transform_indices = @transform_7, window_bounds = array<i64: 128, 128>}]} {
    %c0 = arith.constant 0 : index
    %c0_0 = arith.constant 0 : index
    %0 = vector.load %arg1[%c0, %c0_0] : memref<128x4xbf16, #tpu.memory_space<vmem>>, vector<128x4xbf16>
    %c0_1 = arith.constant 0 : index
    %c0_2 = arith.constant 0 : index
    %1 = vector.load %arg2[%c0_1, %c0_2] : memref<4x128xbf16, #tpu.memory_space<vmem>>, vector<4x128xbf16>
    %cst = arith.constant dense<0.000000e+00> : vector<128x128xf32>
    %2 = tpu.matmul %0, %1, %cst {dimension_numbers = #tpu.dot_dimension_numbers<[1], [0], [0], [1], [0, 0, 1, 1], [], []>} : vector<128x4xbf16>, vector<4x128xbf16>, vector<128x128xf32> -> vector<128x128xf32>
    %c0_3 = arith.constant 0 : index
    %c0_4 = arith.constant 0 : index
    %3 = vector.load %arg3[%c0_3, %c0_4] : memref<1x128xf32, #tpu.memory_space<vmem>>, vector<1x128xf32>
    %4 = vector.broadcast %3 : vector<1x128xf32> to vector<128x128xf32>
    %5 = arith.addf %2, %4 : vector<128x128xf32>
    %cst_5 = arith.constant 0.000000e+00 : f32
    %6 = vector.broadcast %cst_5 : f32 to vector<128x128xf32>
    %7 = arith.maximumf %5, %6 : vector<128x128xf32>
    %8 = arith.truncf %7 : vector<128x128xf32> to vector<128x128xbf16>
    %c0_6 = arith.constant 0 : index
    %c0_7 = arith.constant 0 : index
    %9 = vector.load %arg4[%c0_6, %c0_7] : memref<128x128xbf16, #tpu.memory_space<vmem>>, vector<128x128xbf16>
    %cst_8 = arith.constant dense<0.000000e+00> : vector<128x128xf32>
    %10 = tpu.matmul %8, %9, %cst_8 {dimension_numbers = #tpu.dot_dimension_numbers<[1], [0], [0], [1], [0, 0, 1, 1], [], []>} : vector<128x128xbf16>, vector<128x128xbf16>, vector<128x128xf32> -> vector<128x128xf32>
    %c0_9 = arith.constant 0 : index
    %c0_10 = arith.constant 0 : index
    %11 = vector.load %arg5[%c0_9, %c0_10] : memref<1x128xf32, #tpu.memory_space<vmem>>, vector<1x128xf32>
    %12 = vector.broadcast %11 : vector<1x128xf32> to vector<128x128xf32>
    %13 = arith.addf %10, %12 : vector<128x128xf32>
    %cst_11 = arith.constant 0.000000e+00 : f32
    %14 = vector.broadcast %cst_11 : f32 to vector<128x128xf32>
    %15 = arith.maximumf %13, %14 : vector<128x128xf32>
    %16 = arith.truncf %15 : vector<128x128xf32> to vector<128x128xbf16>
    %c0_12 = arith.constant 0 : index
    %c0_13 = arith.constant 0 : index
    %17 = vector.load %arg6[%c0_12, %c0_13] : memref<128x128xbf16, #tpu.memory_space<vmem>>, vector<128x128xbf16>
    %cst_14 = arith.constant dense<0.000000e+00> : vector<128x128xf32>
    %18 = tpu.matmul %16, %17, %cst_14 {dimension_numbers = #tpu.dot_dimension_numbers<[1], [0], [0], [1], [0, 0, 1, 1], [], []>} : vector<128x128xbf16>, vector<128x128xbf16>, vector<128x128xf32> -> vector<128x128xf32>
    %c0_15 = arith.constant 0 : index
    %c0_16 = arith.constant 0 : index
    %19 = vector.load %arg7[%c0_15, %c0_16] : memref<1x128xf32, #tpu.memory_space<vmem>>, vector<1x128xf32>
    %20 = vector.broadcast %19 : vector<1x128xf32> to vector<128x128xf32>
    %21 = arith.addf %18, %20 : vector<128x128xf32>
    %c0_17 = arith.constant 0 : index
    %c0_18 = arith.constant 0 : index
    %22 = vector.load %arg8[%c0_17, %c0_18] : memref<128x128xf32, #tpu.memory_space<vmem>>, vector<128x128xf32>
    tpu.vector_store %arg8[%c0_17, %c0_18], %21 {strides = array<i32>} : memref<128x128xf32, #tpu.memory_space<vmem>>, vector<128x128xf32>,
    return
  }
  func.func @transform_0(%arg0: i32) -> (i32, i32) {
    %c0_i32 = arith.constant 0 : i32
    %c0_i32_0 = arith.constant 0 : i32
    return %arg0, %c0_i32 : i32, i32
  }
  func.func @transform_1(%arg0: i32) -> (i32, i32) {
    %c0_i32 = arith.constant 0 : i32
    %c0_i32_0 = arith.constant 0 : i32
    %c0_i32_1 = arith.constant 0 : i32
    return %c0_i32, %c0_i32_0 : i32, i32
  }
  func.func @transform_2(%arg0: i32) -> (i32, i32) {
    %c0_i32 = arith.constant 0 : i32
    %c0_i32_0 = arith.constant 0 : i32
    %c0_i32_1 = arith.constant 0 : i32
    return %c0_i32, %c0_i32_0 : i32, i32
  }
  func.func @transform_3(%arg0: i32) -> (i32, i32) {
    %c0_i32 = arith.constant 0 : i32
    %c0_i32_0 = arith.constant 0 : i32
    %c0_i32_1 = arith.constant 0 : i32
    return %c0_i32, %c0_i32_0 : i32, i32
  }
  func.func @transform_4(%arg0: i32) -> (i32, i32) {
    %c0_i32 = arith.constant 0 : i32
    %c0_i32_0 = arith.constant 0 : i32
    %c0_i32_1 = arith.constant 0 : i32
    return %c0_i32, %c0_i32_0 : i32, i32
  }
  func.func @transform_5(%arg0: i32) -> (i32, i32) {
    %c0_i32 = arith.constant 0 : i32
    %c0_i32_0 = arith.constant 0 : i32
    %c0_i32_1 = arith.constant 0 : i32
    return %c0_i32, %c0_i32_0 : i32, i32
  }
  func.func @transform_6(%arg0: i32) -> (i32, i32) {
    %c0_i32 = arith.constant 0 : i32
    %c0_i32_0 = arith.constant 0 : i32
    %c0_i32_1 = arith.constant 0 : i32
    return %c0_i32, %c0_i32_0 : i32, i32
  }
  func.func @transform_7(%arg0: i32) -> (i32, i32) {
    %c0_i32 = arith.constant 0 : i32
    %c0_i32_0 = arith.constant 0 : i32
    return %arg0, %c0_i32 : i32, i32
  }
}

</mosaic_0001>

<llo_original>
// kernel: tpu_custom_call.1
$region0: #{tpu_custom_call.1}
  #allocation0 [shape = 'u32[]', space=smem, size = 0x4, offset = 0x4, fixed_abs, tag = 'smem constant byte address 0x4 - core index']
  #allocation1 [shape = 'u32[144,128]{1,0:T(1,128)}', space=vmem, size = 0x12000, scoped, tag = 'internal scratch']
  %s0 = inlined_call_operand.vmem [shape: bf16[512,4], index: 0, kind: input, shape index: {}]
  %s1 = inlined_call_operand.vmem [shape: bf16[4,128], index: 1, kind: input, shape index: {}]
  %s2 = inlined_call_operand.vmem [shape: f32[1,128], index: 2, kind: input, shape index: {}]
  %s3 = inlined_call_operand.vmem [shape: bf16[128,128], index: 3, kind: input, shape index: {}]
  %s4 = inlined_call_operand.vmem [shape: f32[1,128], index: 4, kind: input, shape index: {}]
  %s5 = inlined_call_operand.vmem [shape: bf16[128,128], index: 5, kind: input, shape index: {}]
  %s6 = inlined_call_operand.vmem [shape: f32[1,128], index: 6, kind: input, shape index: {}]
  %s7 = inlined_call_operand.hbm [shape: f32[512,128], index: 7, kind: output, shape index: {}]
  %s8 = sld [smem:[#allocation0]]
  $region61: #{tpu_custom_call.1} parent=0
    _
  %s10 = ssub.s32 1, %s8
  %s11 = scalar_select 0, %s10, %s8
  $region1: #{tpu_custom_call.1} parent=0
    #allocation2 [shape = 'u8[131072]{0}', space=vmem, size = 0x20000, scoped, tag = 'output window, operand 0']
    #allocation3 [shape = 's32[2]{0}', space=sflag, size = 0x8, scoped, tag = 'scoped memory for tpu_custom_call.1']
    %12 = vsyncpa [#allocation3], 0
    %s13 = scalar_lea.sflag [#allocation3], 1
    %14 = vsyncpa %s13, 0
    loop: start=0, step=1, limit=6
    $region2: #{tpu_custom_call.1} parent=1 // loop_pre_header
      _
    $region3: #{tpu_custom_call.1} parent=1 // loop_header
      %s16 = sphi 0, %s20
      %p17 = scmp.ge.s32.totalorder %s16, 6
      %s26 = sphi 0, %s28
      %s29 = sphi 0, %s26
      %s30 = sphi 0, %s29
      %s46 = sphi 0, %s30
      %s50 = sphi 0, %s50
      %s52 = sphi 0, %s50
      %s53 = sphi 0, %s52
      %s67 = sphi 0, %s53
      %s71 = sphi 0, %s71
      %s73 = sphi 0, %s71
      %s74 = sphi 0, %s73
      %s88 = sphi 0, %s74
      %s92 = sphi 0, %s92
      %s94 = sphi 0, %s92
      %s95 = sphi 0, %s94
      %s109 = sphi 0, %s95
      %s113 = sphi 0, %s113
      %s115 = sphi 0, %s113
      %s116 = sphi 0, %s115
      %s130 = sphi 0, %s116
      %s134 = sphi 0, %s134
      %s136 = sphi 0, %s134
      %s137 = sphi 0, %s136
      %s151 = sphi 0, %s137
      %s155 = sphi 0, %s155
      %s157 = sphi 0, %s155
      %s158 = sphi 0, %s157
      %s172 = sphi 0, %s158
      %s178 = sphi 0, %s180
      %s181 = sphi 0, %s178
      %s182 = sphi 0, %s181
      %s198 = sphi 0, %s182
    $region4: #{tpu_custom_call.1} parent=1 // loop_header_branch
      %19 = sbr.rel (%p17) target = $region8
    $region5: #{tpu_custom_call.1} parent=1 // loop_body
      %s21 = ssub.s32 %s16, 1
      %s22 = ssub.s32 %s16, 2
      %s23 = sadd.s32 %s16, 1
      %s24 = ssub.s32 %s16, %s23
      %p25 = scmp.eq.s32.totalorder %s24, 0
      %s27 = sadd.s32 %s26, 1
      %s28 = scalar_select %p25, %s26, %s27
      %p31 = pneg %p25
      %p32 = scmp.eq.s32.totalorder %s16, 3
      %p33 = por %p31, %p32
      %p34 = scmp.ne.s32.totalorder %s26, %s29
      %p35 = scmp.eq.s32.totalorder %s16, 0
      %p36 = por %p34, %p35
      %p37 = scmp.ne.s32.totalorder %s26, %s29
      %p38 = scmp.eq.s32.totalorder %s21, 3
      %p39 = por %p37, %p38
      %p40 = scmp.ne.s32.totalorder %s29, %s30
      %p41 = scmp.eq.s32.totalorder %s21, 0
      %p42 = por %p40, %p41
      %p43 = scmp.ne.s32.totalorder %s29, %s30
      %p44 = scmp.eq.s32.totalorder %s22, 3
      %p45 = por %p43, %p44
      %p47 = scmp.ne.s32.totalorder %s30, %s46
      %p48 = scmp.eq.s32.totalorder %s22, 0
      %p49 = por %p47, %p48
      %s51 = sadd.s32 %s50, 1
      %p54 = scmp.eq.s32.totalorder %s16, 3
      %p55 = scmp.ne.s32.totalorder %s50, %s52
      %p56 = scmp.eq.s32.totalorder %s16, 0
      %p57 = por %p55, %p56
      %p58 = scmp.ne.s32.totalorder %s50, %s52
      %p59 = scmp.eq.s32.totalorder %s21, 3
      %p60 = por %p58, %p59
      %p61 = scmp.ne.s32.totalorder %s52, %s53
      %p62 = scmp.eq.s32.totalorder %s21, 0
      %p63 = por %p61, %p62
      %p64 = scmp.ne.s32.totalorder %s52, %s53
      %p65 = scmp.eq.s32.totalorder %s22, 3
      %p66 = por %p64, %p65
      %p68 = scmp.ne.s32.totalorder %s53, %s67
      %p69 = scmp.eq.s32.totalorder %s22, 0
      %p70 = por %p68, %p69
      %s72 = sadd.s32 %s71, 1
      %p75 = scmp.eq.s32.totalorder %s16, 3
      %p76 = scmp.ne.s32.totalorder %s71, %s73
      %p77 = scmp.eq.s32.totalorder %s16, 0
      %p78 = por %p76, %p77
      %p79 = scmp.ne.s32.totalorder %s71, %s73
      %p80 = scmp.eq.s32.totalorder %s21, 3
      %p81 = por %p79, %p80
      %p82 = scmp.ne.s32.totalorder %s73, %s74
      %p83 = scmp.eq.s32.totalorder %s21, 0
      %p84 = por %p82, %p83
      %p85 = scmp.ne.s32.totalorder %s73, %s74
      %p86 = scmp.eq.s32.totalorder %s22, 3
      %p87 = por %p85, %p86
      %p89 = scmp.ne.s32.totalorder %s74, %s88
      %p90 = scmp.eq.s32.totalorder %s22, 0
      %p91 = por %p89, %p90
      %s93 = sadd.s32 %s92, 1
      %p96 = scmp.eq.s32.totalorder %s16, 3
      %p97 = scmp.ne.s32.totalorder %s92, %s94
      %p98 = scmp.eq.s32.totalorder %s16, 0
      %p99 = por %p97, %p98
      %p100 = scmp.ne.s32.totalorder %s92, %s94
      %p101 = scmp.eq.s32.totalorder %s21, 3
      %p102 = por %p100, %p101
      %p103 = scmp.ne.s32.totalorder %s94, %s95
      %p104 = scmp.eq.s32.totalorder %s21, 0
      %p105 = por %p103, %p104
      %p106 = scmp.ne.s32.totalorder %s94, %s95
      %p107 = scmp.eq.s32.totalorder %s22, 3
      %p108 = por %p106, %p107
      %p110 = scmp.ne.s32.totalorder %s95, %s109
      %p111 = scmp.eq.s32.totalorder %s22, 0
      %p112 = por %p110, %p111
      %s114 = sadd.s32 %s113, 1
      %p117 = scmp.eq.s32.totalorder %s16, 3
      %p118 = scmp.ne.s32.totalorder %s113, %s115
      %p119 = scmp.eq.s32.totalorder %s16, 0
      %p120 = por %p118, %p119
      %p121 = scmp.ne.s32.totalorder %s113, %s115
      %p122 = scmp.eq.s32.totalorder %s21, 3
      %p123 = por %p121, %p122
      %p124 = scmp.ne.s32.totalorder %s115, %s116
      %p125 = scmp.eq.s32.totalorder %s21, 0
      %p126 = por %p124, %p125
      %p127 = scmp.ne.s32.totalorder %s115, %s116
      %p128 = scmp.eq.s32.totalorder %s22, 3
      %p129 = por %p127, %p128
      %p131 = scmp.ne.s32.totalorder %s116, %s130
      %p132 = scmp.eq.s32.totalorder %s22, 0
      %p133 = por %p131, %p132
      %s135 = sadd.s32 %s134, 1
      %p138 = scmp.eq.s32.totalorder %s16, 3
      %p139 = scmp.ne.s32.totalorder %s134, %s136
      %p140 = scmp.eq.s32.totalorder %s16, 0
      %p141 = por %p139, %p140
      %p142 = scmp.ne.s32.totalorder %s134, %s136
      %p143 = scmp.eq.s32.totalorder %s21, 3
      %p144 = por %p142, %p143
      %p145 = scmp.ne.s32.totalorder %s136, %s137
      %p146 = scmp.eq.s32.totalorder %s21, 0
      %p147 = por %p145, %p146
      %p148 = scmp.ne.s32.totalorder %s136, %s137
      %p149 = scmp.eq.s32.totalorder %s22, 3
      %p150 = por %p148, %p149
      %p152 = scmp.ne.s32.totalorder %s137, %s151
      %p153 = scmp.eq.s32.totalorder %s22, 0
      %p154 = por %p152, %p153
      %s156 = sadd.s32 %s155, 1
      %p159 = scmp.eq.s32.totalorder %s16, 3
      %p160 = scmp.ne.s32.totalorder %s155, %s157
      %p161 = scmp.eq.s32.totalorder %s16, 0
      %p162 = por %p160, %p161
      %p163 = scmp.ne.s32.totalorder %s155, %s157
      %p164 = scmp.eq.s32.totalorder %s21, 3
      %p165 = por %p163, %p164
      %p166 = scmp.ne.s32.totalorder %s157, %s158
      %p167 = scmp.eq.s32.totalorder %s21, 0
      %p168 = por %p166, %p167
      %p169 = scmp.ne.s32.totalorder %s157, %s158
      %p170 = scmp.eq.s32.totalorder %s22, 3
      %p171 = por %p169, %p170
      %p173 = scmp.ne.s32.totalorder %s158, %s172
      %p174 = scmp.eq.s32.totalorder %s22, 0
      %p175 = por %p173, %p174
      %s176 = ssub.s32 %s16, %s23
      %p177 = scmp.eq.s32.totalorder %s176, 0
      %s179 = sadd.s32 %s178, 1
      %s180 = scalar_select %p177, %s178, %s179
      %p183 = pneg %p177
      %p184 = scmp.eq.s32.totalorder %s16, 3
      %p185 = por %p183, %p184
      %p186 = scmp.ne.s32.totalorder %s178, %s181
      %p187 = scmp.eq.s32.totalorder %s16, 0
      %p188 = por %p186, %p187
      %p189 = scmp.ne.s32.totalorder %s178, %s181
      %p190 = scmp.eq.s32.totalorder %s21, 3
      %p191 = por %p189, %p190
      %p192 = scmp.ne.s32.totalorder %s181, %s182
      %p193 = scmp.eq.s32.totalorder %s21, 0
      %p194 = por %p192, %p193
      %p195 = scmp.ne.s32.totalorder %s181, %s182
      %p196 = scmp.eq.s32.totalorder %s22, 3
      %p197 = por %p195, %p196
      %p199 = scmp.ne.s32.totalorder %s182, %s198
      %p200 = scmp.eq.s32.totalorder %s22, 0
      %p201 = por %p199, %p200
      %p202 = scmp.le.s32.totalorder 1, %s16
      %p203 = scmp.lt.s32.totalorder %s16, 5
      %p204 = pnand %p202, %p203
      %p205 = pneg %p204
      // Predicated region
      $region9: #{tpu_custom_call.1} parent=5 // pred_check
        _
      $region10: #{tpu_custom_call.1} parent=5 // pred_check_branch
        %207 = sbr.rel (%p204) target = $region12
      $region11: #{tpu_custom_call.1} parent=5 // pred_region
        %s208 = ssub.s32 %s16, 1
        // Predicated region
        $region13: #{tpu_custom_call.1} parent=11 // pred_check
          %p209 = pneg %p63
        $region14: #{tpu_custom_call.1} parent=11 // pred_check_branch
          %211 = sbr.rel (%p209) target = $region16
        $region15: #{tpu_custom_call.1} parent=11 // pred_region
          _
        $region16: #{tpu_custom_call.1} parent=11 // pred_fallthru
          _
        // Predicated region
        $region17: #{tpu_custom_call.1} parent=11 // pred_check
          %p212 = pneg %p84
        $region18: #{tpu_custom_call.1} parent=11 // pred_check_branch
          %214 = sbr.rel (%p212) target = $region20
        $region19: #{tpu_custom_call.1} parent=11 // pred_region
          _
        $region20: #{tpu_custom_call.1} parent=11 // pred_fallthru
          _
        // Predicated region
        $region21: #{tpu_custom_call.1} parent=11 // pred_check
          %p215 = pneg %p105
        $region22: #{tpu_custom_call.1} parent=11 // pred_check_branch
          %217 = sbr.rel (%p215) target = $region24
        $region23: #{tpu_custom_call.1} parent=11 // pred_region
          _
        $region24: #{tpu_custom_call.1} parent=11 // pred_fallthru
          _
        // Predicated region
        $region25: #{tpu_custom_call.1} parent=11 // pred_check
          %p218 = pneg %p126
        $region26: #{tpu_custom_call.1} parent=11 // pred_check_branch
          %220 = sbr.rel (%p218) target = $region28
        $region27: #{tpu_custom_call.1} parent=11 // pred_region
          _
        $region28: #{tpu_custom_call.1} parent=11 // pred_fallthru
          _
        // Predicated region
        $region29: #{tpu_custom_call.1} parent=11 // pred_check
          %p221 = pneg %p147
        $region30: #{tpu_custom_call.1} parent=11 // pred_check_branch
          %223 = sbr.rel (%p221) target = $region32
        $region31: #{tpu_custom_call.1} parent=11 // pred_region
          _
        $region32: #{tpu_custom_call.1} parent=11 // pred_fallthru
          _
        // Predicated region
        $region33: #{tpu_custom_call.1} parent=11 // pred_check
          %p224 = pneg %p168
        $region34: #{tpu_custom_call.1} parent=11 // pred_check_branch
          %226 = sbr.rel (%p224) target = $region36
        $region35: #{tpu_custom_call.1} parent=11 // pred_region
          _
        $region36: #{tpu_custom_call.1} parent=11 // pred_fallthru
          _
      $region12: #{tpu_custom_call.1} parent=5 // pred_fallthru
        _
      %p227 = scmp.lt.s32.totalorder %s16, 4
      // Predicated region
      $region37: #{tpu_custom_call.1} parent=5 // pred_check
        %p228 = pneg %p227
      $region38: #{tpu_custom_call.1} parent=5 // pred_check_branch
        %230 = sbr.rel (%p228) target = $region40
      $region39: #{tpu_custom_call.1} parent=5 // pred_region
        // Predicated region
        $region41: #{tpu_custom_call.1} parent=39 // pred_check
          %p231 = pneg %p36
        $region42: #{tpu_custom_call.1} parent=39 // pred_check_branch
          %233 = sbr.rel (%p231) target = $region44
        $region43: #{tpu_custom_call.1} parent=39 // pred_region
          %s234 = smul.u32 16, %s16
          %p235 = scmp.lt.s32.totalorder %s234, 63
          %s236 = scalar_select %p235, %s234, 63
          %s237 = smul.addr %s236, 4
          %s238 = scalar_lea.vmem %s0, %s237
          %s239 = smul.u32 16, %s16
        $region44: #{tpu_custom_call.1} parent=39 // pred_fallthru
          _
      $region40: #{tpu_custom_call.1} parent=5 // pred_fallthru
        _
      %p240 = scmp.le.s32.totalorder 1, %s16
      %p241 = scmp.lt.s32.totalorder %s16, 5
      %p242 = pnand %p240, %p241
      %p243 = pneg %p242
      // Predicated region
      $region45: #{tpu_custom_call.1} parent=5 // pred_check
        _
      $region46: #{tpu_custom_call.1} parent=5 // pred_check_branch
        %245 = sbr.rel (%p242) target = $region48
      $region47: #{tpu_custom_call.1} parent=5 // pred_region
        %s246 = ssub.s32 %s16, 1
        %s247 = smul.u32 16, %s21
        %p248 = scmp.lt.s32.totalorder %s247, 63
        %s249 = scalar_select %p248, %s247, 63
        %s250 = smul.addr %s249, 4
        %s251 = scalar_lea.vmem %s0, %s250
        %p252 = pneg %p42
        %p253 = pneg %p39
        %p254 = pneg %p63
        %p255 = pneg %p60
        %p256 = pneg %p84
        %p257 = pneg %p81
        %p258 = pneg %p105
        %p259 = pneg %p102
        %p260 = pneg %p126
        %p261 = pneg %p123
        %p262 = pneg %p147
        %p263 = pneg %p144
        %p264 = pneg %p168
        %p265 = pneg %p165
        %p266 = pneg %p194
        %p267 = pneg %p191
        %s268 = sand.u32 %s181, 1
        %s269 = scalar_lea.sflag [#allocation3], %s268
        %s270 = sand.u32 %s181, 1
        %s271 = smul.addr %s270, 128
        %s272 = scalar_lea.vmem [#allocation2], %s271
        %s273 = smul.u32 16, %s21
        %p274 = scmp.lt.s32.totalorder %s273, 63
        %s275 = scalar_select %p274, %s273, 63
        %s276 = smul.addr %s275, 4
        %s277 = scalar_lea.vmem %s0, %s276
        %s278 = smul.u32 16, %s21
        %s279 = smul.u32 16, %s21
        %v281 = vld [vmem:[%s277] sm:$0xf]
        %v282 = vld [vmem:[%s277 + $0x4] sm:$0xf]
        %v283 = vld [vmem:[%s277 + $0x8] sm:$0xf]
        %v284 = vld [vmem:[%s277 + $0xc] sm:$0xf]
        %v285 = vld [vmem:[%s277 + $0x10] sm:$0xf]
        %v286 = vld [vmem:[%s277 + $0x14] sm:$0xf]
        %v287 = vld [vmem:[%s277 + $0x18] sm:$0xf]
        %v288 = vld [vmem:[%s277 + $0x1c] sm:$0xf]
        %v289 = vld [vmem:[%s277 + $0x20] sm:$0xf]
        %v290 = vld [vmem:[%s277 + $0x24] sm:$0xf]
        %v291 = vld [vmem:[%s277 + $0x28] sm:$0xf]
        %v292 = vld [vmem:[%s277 + $0x2c] sm:$0xf]
        %v293 = vld [vmem:[%s277 + $0x30] sm:$0xf]
        %v294 = vld [vmem:[%s277 + $0x34] sm:$0xf]
        %v295 = vld [vmem:[%s277 + $0x38] sm:$0xf]
        %v296 = vld [vmem:[%s277 + $0x3c] sm:$0xf]
        %v297 = vld [vmem:[%s1] sm:$0x3]
        %v298 = vld [vmem:[%s2] sm:$0x1]
        %v300 = vlaneseq
        %v301 = vshrl.u32 %v300, 7
        %v302 = vsub.s32 0, %v301
        %v303 = vrot.slane %v298, %v302
        %v321 = vunpack.c.l.b16 %v281
        %v322 = vunpack.c.l.b16 %v282
        %v323 = vunpack.c.l.b16 %v283
        %v324 = vunpack.c.l.b16 %v284
        %v325 = vunpack.c.l.b16 %v285
        %v326 = vunpack.c.l.b16 %v286
        %v327 = vunpack.c.l.b16 %v287
        %v328 = vunpack.c.l.b16 %v288
        %v329 = vunpack.c.l.b16 %v289
        %v330 = vunpack.c.l.b16 %v290
        %v331 = vunpack.c.l.b16 %v291
        %v332 = vunpack.c.l.b16 %v292
        %v333 = vunpack.c.l.b16 %v293
        %v334 = vunpack.c.l.b16 %v294
        %v335 = vunpack.c.l.b16 %v295
        %v336 = vunpack.c.l.b16 %v296
        %v337 = vpack.c.b16 %v322, %v321
        %v338 = vpack.c.b16 %v324, %v323
        %v339 = vpack.c.b16 %v326, %v325
        %v340 = vpack.c.b16 %v328, %v327
        %v341 = vpack.c.b16 %v330, %v329
        %v342 = vpack.c.b16 %v332, %v331
        %v343 = vpack.c.b16 %v334, %v333
        %v344 = vpack.c.b16 %v336, %v335
        %vm345 = vcmask 31744
        %v347 = vsel %vm345, %v337, 0
        %v350 = vsel %vm345, %v338, 0
        %v353 = vsel %vm345, %v339, 0
        %v356 = vsel %vm345, %v340, 0
        %v359 = vsel %vm345, %v341, 0
        %v362 = vsel %vm345, %v342, 0
        %v365 = vsel %vm345, %v343, 0
        %v368 = vsel %vm345, %v344, 0
        %vm370 = vcmask 1041408
        %v372 = vsel %vm370, %v297, 0
        %374 = vmatprep.subr.bf16.mxu0 0
        %375 = vmatpush1.bf16.msra.mxu0 %v372
        %376 = vmatprep.subr.bf16.mxu0 0
        %377 = vmatpush1.bf16.msra.mxu0 0
        %378 = vmatprep.subr.bf16.mxu0 0
        %379 = vmatpush1.bf16.msra.mxu0 0
        %380 = vmatprep.subr.bf16.mxu0 0
        %381 = vmatpush1.bf16.msra.mxu0 0
        %382 = vmatprep.subr.bf16.mxu0 0
        %383 = vmatpush1.bf16.msra.mxu0 0
        %384 = vmatprep.subr.bf16.mxu0 0
        %385 = vmatpush1.bf16.msra.mxu0 0
        %386 = vmatprep.subr.bf16.mxu0 0
        %387 = vmatpush1.bf16.msra.mxu0 0
        %388 = vmatprep.subr.bf16.mxu0 0
        %389 = vmatpush1.bf16.msra.mxu0 0
        %390 = vmatprep.subr.bf16.mxu0 0
        %391 = vmatpush1.bf16.msra.mxu0 0
        %392 = vmatprep.subr.bf16.mxu0 0
        %393 = vmatpush1.bf16.msra.mxu0 0
        %394 = vmatprep.subr.bf16.mxu0 0
        %395 = vmatpush1.bf16.msra.mxu0 0
        %396 = vmatprep.subr.bf16.mxu0 0
        %397 = vmatpush1.bf16.msra.mxu0 0
        %398 = vmatprep.subr.bf16.mxu0 0
        %399 = vmatpush1.bf16.msra.mxu0 0
        %400 = vmatprep.subr.bf16.mxu0 0
        %401 = vmatpush1.bf16.msra.mxu0 0
        %402 = vmatprep.subr.bf16.mxu0 0
        %403 = vmatpush1.bf16.msra.mxu0 0
        %404 = vmatprep.subr.bf16.mxu0 0
        %405 = vmatpush1.bf16.msra.mxu0 0
        %406 = vmatprep.mubr.bf16.mxu0 0
        %407 = vmatmul.mubr.bf16.gmra.mrb[0].mxu0 %v347
        %v408 = vpop.f32.mrb[0].mxu0
        %v409 = vadd.f32 %v303, %v408
        %v410 = vpop.f32.mrb[0].mxu0
        %v411 = vpop.f32.mrb[0].mxu0
        %v412 = vadd.f32 %v303, %v411
        %v413 = vpop.f32.mrb[0].mxu0
        %414 = vmatprep.mubr.bf16.mxu0 0
        %415 = vmatmul.mubr.bf16.gmra.mrb[0].mxu0 %v350
        %v416 = vpop.f32.mrb[0].mxu0
        %v417 = vadd.f32 %v303, %v416
        %v418 = vpop.f32.mrb[0].mxu0
        %v419 = vpop.f32.mrb[0].mxu0
        %v420 = vadd.f32 %v303, %v419
        %v421 = vpop.f32.mrb[0].mxu0
        %422 = vmatprep.mubr.bf16.mxu0 0
        %423 = vmatmul.mubr.bf16.gmra.mrb[0].mxu0 %v353
        %v424 = vpop.f32.mrb[0].mxu0
        %v425 = vadd.f32 %v303, %v424
        %v426 = vpop.f32.mrb[0].mxu0
        %v427 = vpop.f32.mrb[0].mxu0
        %v428 = vadd.f32 %v303, %v427
        %v429 = vpop.f32.mrb[0].mxu0
        %430 = vmatprep.mubr.bf16.mxu0 0
        %431 = vmatmul.mubr.bf16.gmra.mrb[0].mxu0 %v356
        %v432 = vpop.f32.mrb[0].mxu0
        %v433 = vadd.f32 %v303, %v432
        %v434 = vpop.f32.mrb[0].mxu0
        %v435 = vpop.f32.mrb[0].mxu0
        %v436 = vadd.f32 %v303, %v435
        %v437 = vpop.f32.mrb[0].mxu0
        %438 = vmatprep.mubr.bf16.mxu0 0
        %439 = vmatmul.mubr.bf16.gmra.mrb[0].mxu0 %v359
        %v440 = vpop.f32.mrb[0].mxu0
        %v441 = vadd.f32 %v303, %v440
        %v442 = vpop.f32.mrb[0].mxu0
        %v443 = vpop.f32.mrb[0].mxu0
        %v444 = vadd.f32 %v303, %v443
        %v445 = vpop.f32.mrb[0].mxu0
        %446 = vmatprep.mubr.bf16.mxu0 0
        %447 = vmatmul.mubr.bf16.gmra.mrb[0].mxu0 %v362
        %v448 = vpop.f32.mrb[0].mxu0
        %v449 = vadd.f32 %v303, %v448
        %v450 = vpop.f32.mrb[0].mxu0
        %v451 = vpop.f32.mrb[0].mxu0
        %v452 = vadd.f32 %v303, %v451
        %v453 = vpop.f32.mrb[0].mxu0
        %454 = vmatprep.mubr.bf16.mxu0 0
        %455 = vmatmul.mubr.bf16.gmra.mrb[0].mxu0 %v365
        %v456 = vpop.f32.mrb[0].mxu0
        %v457 = vadd.f32 %v303, %v456
        %v458 = vpop.f32.mrb[0].mxu0
        %v459 = vpop.f32.mrb[0].mxu0
        %v460 = vadd.f32 %v303, %v459
        %v461 = vpop.f32.mrb[0].mxu0
        %462 = vmatprep.mubr.bf16.mxu0 0
        %463 = vmatmul.mubr.bf16.gmra.mrb[0].mxu0 %v368
        %v464 = vpop.f32.mrb[0].mxu0
        %v465 = vadd.f32 %v303, %v464
        %v466 = vpop.f32.mrb[0].mxu0
        %v467 = vpop.f32.mrb[0].mxu0
        %v468 = vadd.f32 %v303, %v467
        %v469 = vpop.f32.mrb[0].mxu0
        %470 = vdwg.mxu0
        %v471 = vmax.f32 %v409, 0.0
        %v472 = vmax.f32 %v412, 0.0
        %v473 = vmax.f32 %v417, 0.0
        %v474 = vmax.f32 %v420, 0.0
        %v475 = vmax.f32 %v425, 0.0
        %v476 = vmax.f32 %v428, 0.0
        %v477 = vmax.f32 %v433, 0.0
        %v478 = vmax.f32 %v436, 0.0
        %v479 = vmax.f32 %v441, 0.0
        %v480 = vmax.f32 %v444, 0.0
        %v481 = vmax.f32 %v449, 0.0
        %v482 = vmax.f32 %v452, 0.0
        %v483 = vmax.f32 %v457, 0.0
        %v484 = vmax.f32 %v460, 0.0
        %v485 = vmax.f32 %v465, 0.0
        %v486 = vmax.f32 %v468, 0.0
        %v487 = vpack.c.bf16 %v472, %v471
        %v488 = vpack.c.bf16 %v474, %v473
        %v489 = vpack.c.bf16 %v476, %v475
        %v490 = vpack.c.bf16 %v478, %v477
        %v491 = vpack.c.bf16 %v480, %v479
        %v492 = vpack.c.bf16 %v482, %v481
        %v493 = vpack.c.bf16 %v484, %v483
        %v494 = vpack.c.bf16 %v486, %v485
        %v495 = vld [vmem:[%s3] sm:$0xf]
        %v496 = vld [vmem:[%s3 + $0x4] sm:$0xf]
        %v497 = vld [vmem:[%s3 + $0x8] sm:$0xf]
        %v498 = vld [vmem:[%s3 + $0xc] sm:$0xf]
        %v499 = vld [vmem:[%s3 + $0x10] sm:$0xf]
        %v500 = vld [vmem:[%s3 + $0x14] sm:$0xf]
        %v501 = vld [vmem:[%s3 + $0x18] sm:$0xf]
        %v502 = vld [vmem:[%s3 + $0x1c] sm:$0xf]
        %v503 = vld [vmem:[%s3 + $0x20] sm:$0xf]
        %v504 = vld [vmem:[%s3 + $0x24] sm:$0xf]
        %v505 = vld [vmem:[%s3 + $0x28] sm:$0xf]
        %v506 = vld [vmem:[%s3 + $0x2c] sm:$0xf]
        %v507 = vld [vmem:[%s3 + $0x30] sm:$0xf]
        %v508 = vld [vmem:[%s3 + $0x34] sm:$0xf]
        %v509 = vld [vmem:[%s3 + $0x38] sm:$0xf]
        %v510 = vld [vmem:[%s3 + $0x3c] sm:$0xf]
        %v511 = vld [vmem:[%s4] sm:$0x1]
        %v513 = vlaneseq
        %v514 = vshrl.u32 %v513, 7
        %v515 = vsub.s32 0, %v514
        %v516 = vrot.slane %v511, %v515
        %v534 = vunpack.c.l.b16 %v495
        %v535 = vunpack.c.l.b16 %v496
        %v536 = vunpack.c.l.b16 %v497
        %v537 = vunpack.c.l.b16 %v498
        %v538 = vunpack.c.l.b16 %v499
        %v539 = vunpack.c.l.b16 %v500
        %v540 = vunpack.c.l.b16 %v501
        %v541 = vunpack.c.l.b16 %v502
        %v542 = vunpack.c.l.b16 %v503
        %v543 = vunpack.c.l.b16 %v504
        %v544 = vunpack.c.l.b16 %v505
        %v545 = vunpack.c.l.b16 %v506
        %v546 = vunpack.c.l.b16 %v507
        %v547 = vunpack.c.l.b16 %v508
        %v548 = vunpack.c.l.b16 %v509
        %v549 = vunpack.c.l.b16 %v510
        %v550 = vpack.c.b16 %v535, %v534
        %v551 = vpack.c.b16 %v537, %v536
        %v552 = vpack.c.b16 %v539, %v538
        %v553 = vpack.c.b16 %v541, %v540
        %v554 = vpack.c.b16 %v543, %v542
        %v555 = vpack.c.b16 %v545, %v544
        %v556 = vpack.c.b16 %v547, %v546
        %v557 = vpack.c.b16 %v549, %v548
        %566 = vmatprep.subr.bf16.mxu0 0
        %567 = vmatpush1.bf16.msra.mxu0 %v550
        %568 = vmatprep.subr.bf16.mxu0 0
        %569 = vmatpush1.bf16.msra.mxu0 %v551
        %570 = vmatprep.subr.bf16.mxu0 0
        %571 = vmatpush1.bf16.msra.mxu0 %v552
        %572 = vmatprep.subr.bf16.mxu0 0
        %573 = vmatpush1.bf16.msra.mxu0 %v553
        %574 = vmatprep.subr.bf16.mxu0 0
        %575 = vmatpush1.bf16.msra.mxu0 %v554
        %576 = vmatprep.subr.bf16.mxu0 0
        %577 = vmatpush1.bf16.msra.mxu0 %v555
        %578 = vmatprep.subr.bf16.mxu0 0
        %579 = vmatpush1.bf16.msra.mxu0 %v556
        %580 = vmatprep.subr.bf16.mxu0 0
        %581 = vmatpush1.bf16.msra.mxu0 %v557
        %582 = vmatprep.subr.bf16.mxu0 0
        %583 = vmatpush1.bf16.msra.mxu0 0
        %584 = vmatprep.subr.bf16.mxu0 0
        %585 = vmatpush1.bf16.msra.mxu0 0
        %586 = vmatprep.subr.bf16.mxu0 0
        %587 = vmatpush1.bf16.msra.mxu0 0
        %588 = vmatprep.subr.bf16.mxu0 0
        %589 = vmatpush1.bf16.msra.mxu0 0
        %590 = vmatprep.subr.bf16.mxu0 0
        %591 = vmatpush1.bf16.msra.mxu0 0
        %592 = vmatprep.subr.bf16.mxu0 0
        %593 = vmatpush1.bf16.msra.mxu0 0
        %594 = vmatprep.subr.bf16.mxu0 0
        %595 = vmatpush1.bf16.msra.mxu0 0
        %596 = vmatprep.subr.bf16.mxu0 0
        %597 = vmatpush1.bf16.msra.mxu0 0
        %598 = vmatprep.mubr.bf16.mxu0 0
        %599 = vmatmul.mubr.bf16.gmra.mrb[0].mxu0 %v487
        %v600 = vpop.f32.mrb[0].mxu0
        %v601 = vadd.f32 %v516, %v600
        %v602 = vpop.f32.mrb[0].mxu0
        %v603 = vpop.f32.mrb[0].mxu0
        %v604 = vadd.f32 %v516, %v603
        %v605 = vpop.f32.mrb[0].mxu0
        %606 = vmatprep.mubr.bf16.mxu0 0
        %607 = vmatmul.mubr.bf16.gmra.mrb[0].mxu0 %v488
        %v608 = vpop.f32.mrb[0].mxu0
        %v609 = vadd.f32 %v516, %v608
        %v610 = vpop.f32.mrb[0].mxu0
        %v611 = vpop.f32.mrb[0].mxu0
        %v612 = vadd.f32 %v516, %v611
        %v613 = vpop.f32.mrb[0].mxu0
        %614 = vmatprep.mubr.bf16.mxu0 0
        %615 = vmatmul.mubr.bf16.gmra.mrb[0].mxu0 %v489
        %v616 = vpop.f32.mrb[0].mxu0
        %v617 = vadd.f32 %v516, %v616
        %v618 = vpop.f32.mrb[0].mxu0
        %v619 = vpop.f32.mrb[0].mxu0
        %v620 = vadd.f32 %v516, %v619
        %v621 = vpop.f32.mrb[0].mxu0
        %622 = vmatprep.mubr.bf16.mxu0 0
        %623 = vmatmul.mubr.bf16.gmra.mrb[0].mxu0 %v490
        %v624 = vpop.f32.mrb[0].mxu0
        %v625 = vadd.f32 %v516, %v624
        %v626 = vpop.f32.mrb[0].mxu0
        %v627 = vpop.f32.mrb[0].mxu0
        %v628 = vadd.f32 %v516, %v627
        %v629 = vpop.f32.mrb[0].mxu0
        %630 = vmatprep.mubr.bf16.mxu0 0
        %631 = vmatmul.mubr.bf16.gmra.mrb[0].mxu0 %v491
        %v632 = vpop.f32.mrb[0].mxu0
        %v633 = vadd.f32 %v516, %v632
        %v634 = vpop.f32.mrb[0].mxu0
        %v635 = vpop.f32.mrb[0].mxu0
        %v636 = vadd.f32 %v516, %v635
        %v637 = vpop.f32.mrb[0].mxu0
        %638 = vmatprep.mubr.bf16.mxu0 0
        %639 = vmatmul.mubr.bf16.gmra.mrb[0].mxu0 %v492
        %v640 = vpop.f32.mrb[0].mxu0
        %v641 = vadd.f32 %v516, %v640
        %v642 = vpop.f32.mrb[0].mxu0
        %v643 = vpop.f32.mrb[0].mxu0
        %v644 = vadd.f32 %v516, %v643
        %v645 = vpop.f32.mrb[0].mxu0
        %646 = vmatprep.mubr.bf16.mxu0 0
        %647 = vmatmul.mubr.bf16.gmra.mrb[0].mxu0 %v493
        %v648 = vpop.f32.mrb[0].mxu0
        %v649 = vadd.f32 %v516, %v648
        %v650 = vpop.f32.mrb[0].mxu0
        %v651 = vpop.f32.mrb[0].mxu0
        %v652 = vadd.f32 %v516, %v651
        %v653 = vpop.f32.mrb[0].mxu0
        %654 = vmatprep.mubr.bf16.mxu0 0
        %655 = vmatmul.mubr.bf16.gmra.mrb[0].mxu0 %v494
        %v656 = vpop.f32.mrb[0].mxu0
        %v657 = vadd.f32 %v516, %v656
        %v658 = vpop.f32.mrb[0].mxu0
        %v659 = vpop.f32.mrb[0].mxu0
        %v660 = vadd.f32 %v516, %v659
        %v661 = vpop.f32.mrb[0].mxu0
        %662 = vdwg.mxu0
        %v663 = vmax.f32 %v601, 0.0
        %v664 = vmax.f32 %v604, 0.0
        %v665 = vmax.f32 %v609, 0.0
        %v666 = vmax.f32 %v612, 0.0
        %v667 = vmax.f32 %v617, 0.0
        %v668 = vmax.f32 %v620, 0.0
        %v669 = vmax.f32 %v625, 0.0
        %v670 = vmax.f32 %v628, 0.0
        %v671 = vmax.f32 %v633, 0.0
        %v672 = vmax.f32 %v636, 0.0
        %v673 = vmax.f32 %v641, 0.0
        %v674 = vmax.f32 %v644, 0.0
        %v675 = vmax.f32 %v649, 0.0
        %v676 = vmax.f32 %v652, 0.0
        %v677 = vmax.f32 %v657, 0.0
        %v678 = vmax.f32 %v660, 0.0
        %v679 = vpack.c.bf16 %v664, %v663
        %v680 = vpack.c.bf16 %v666, %v665
        %v681 = vpack.c.bf16 %v668, %v667
        %v682 = vpack.c.bf16 %v670, %v669
        %v683 = vpack.c.bf16 %v672, %v671
        %v684 = vpack.c.bf16 %v674, %v673
        %v685 = vpack.c.bf16 %v676, %v675
        %v686 = vpack.c.bf16 %v678, %v677
        %v687 = vld [vmem:[%s5] sm:$0xf]
        %v688 = vld [vmem:[%s5 + $0x4] sm:$0xf]
        %v689 = vld [vmem:[%s5 + $0x8] sm:$0xf]
        %v690 = vld [vmem:[%s5 + $0xc] sm:$0xf]
        %v691 = vld [vmem:[%s5 + $0x10] sm:$0xf]
        %v692 = vld [vmem:[%s5 + $0x14] sm:$0xf]
        %v693 = vld [vmem:[%s5 + $0x18] sm:$0xf]
        %v694 = vld [vmem:[%s5 + $0x1c] sm:$0xf]
        %v695 = vld [vmem:[%s5 + $0x20] sm:$0xf]
        %v696 = vld [vmem:[%s5 + $0x24] sm:$0xf]
        %v697 = vld [vmem:[%s5 + $0x28] sm:$0xf]
        %v698 = vld [vmem:[%s5 + $0x2c] sm:$0xf]
        %v699 = vld [vmem:[%s5 + $0x30] sm:$0xf]
        %v700 = vld [vmem:[%s5 + $0x34] sm:$0xf]
        %v701 = vld [vmem:[%s5 + $0x38] sm:$0xf]
        %v702 = vld [vmem:[%s5 + $0x3c] sm:$0xf]
        %v703 = vld [vmem:[%s6] sm:$0x1]
        %v705 = vlaneseq
        %v706 = vshrl.u32 %v705, 7
        %v707 = vsub.s32 0, %v706
        %v708 = vrot.slane %v703, %v707
        %v726 = vunpack.c.l.b16 %v687
        %v727 = vunpack.c.l.b16 %v688
        %v728 = vunpack.c.l.b16 %v689
        %v729 = vunpack.c.l.b16 %v690
        %v730 = vunpack.c.l.b16 %v691
        %v731 = vunpack.c.l.b16 %v692
        %v732 = vunpack.c.l.b16 %v693
        %v733 = vunpack.c.l.b16 %v694
        %v734 = vunpack.c.l.b16 %v695
        %v735 = vunpack.c.l.b16 %v696
        %v736 = vunpack.c.l.b16 %v697
        %v737 = vunpack.c.l.b16 %v698
        %v738 = vunpack.c.l.b16 %v699
        %v739 = vunpack.c.l.b16 %v700
        %v740 = vunpack.c.l.b16 %v701
        %v741 = vunpack.c.l.b16 %v702
        %v742 = vpack.c.b16 %v727, %v726
        %v743 = vpack.c.b16 %v729, %v728
        %v744 = vpack.c.b16 %v731, %v730
        %v745 = vpack.c.b16 %v733, %v732
        %v746 = vpack.c.b16 %v735, %v734
        %v747 = vpack.c.b16 %v737, %v736
        %v748 = vpack.c.b16 %v739, %v738
        %v749 = vpack.c.b16 %v741, %v740
        %758 = vmatprep.subr.bf16.mxu0 0
        %759 = vmatpush1.bf16.msra.mxu0 %v742
        %760 = vmatprep.subr.bf16.mxu0 0
        %761 = vmatpush1.bf16.msra.mxu0 %v743
        %762 = vmatprep.subr.bf16.mxu0 0
        %763 = vmatpush1.bf16.msra.mxu0 %v744
        %764 = vmatprep.subr.bf16.mxu0 0
        %765 = vmatpush1.bf16.msra.mxu0 %v745
        %766 = vmatprep.subr.bf16.mxu0 0
        %767 = vmatpush1.bf16.msra.mxu0 %v746
        %768 = vmatprep.subr.bf16.mxu0 0
        %769 = vmatpush1.bf16.msra.mxu0 %v747
        %770 = vmatprep.subr.bf16.mxu0 0
        %771 = vmatpush1.bf16.msra.mxu0 %v748
        %772 = vmatprep.subr.bf16.mxu0 0
        %773 = vmatpush1.bf16.msra.mxu0 %v749
        %774 = vmatprep.subr.bf16.mxu0 0
        %775 = vmatpush1.bf16.msra.mxu0 0
        %776 = vmatprep.subr.bf16.mxu0 0
        %777 = vmatpush1.bf16.msra.mxu0 0
        %778 = vmatprep.subr.bf16.mxu0 0
        %779 = vmatpush1.bf16.msra.mxu0 0
        %780 = vmatprep.subr.bf16.mxu0 0
        %781 = vmatpush1.bf16.msra.mxu0 0
        %782 = vmatprep.subr.bf16.mxu0 0
        %783 = vmatpush1.bf16.msra.mxu0 0
        %784 = vmatprep.subr.bf16.mxu0 0
        %785 = vmatpush1.bf16.msra.mxu0 0
        %786 = vmatprep.subr.bf16.mxu0 0
        %787 = vmatpush1.bf16.msra.mxu0 0
        %788 = vmatprep.subr.bf16.mxu0 0
        %789 = vmatpush1.bf16.msra.mxu0 0
        %790 = vmatprep.mubr.bf16.mxu0 0
        %791 = vmatmul.mubr.bf16.gmra.mrb[0].mxu0 %v679
        %v792 = vpop.f32.mrb[0].mxu0
        %v793 = vadd.f32 %v708, %v792
        %v794 = vpop.f32.mrb[0].mxu0
        %v795 = vpop.f32.mrb[0].mxu0
        %v796 = vadd.f32 %v708, %v795
        %v797 = vpop.f32.mrb[0].mxu0
        %798 = vmatprep.mubr.bf16.mxu0 0
        %799 = vmatmul.mubr.bf16.gmra.mrb[0].mxu0 %v680
        %v800 = vpop.f32.mrb[0].mxu0
        %v801 = vadd.f32 %v708, %v800
        %v802 = vpop.f32.mrb[0].mxu0
        %v803 = vpop.f32.mrb[0].mxu0
        %v804 = vadd.f32 %v708, %v803
        %v805 = vpop.f32.mrb[0].mxu0
        %806 = vmatprep.mubr.bf16.mxu0 0
        %807 = vmatmul.mubr.bf16.gmra.mrb[0].mxu0 %v681
        %v808 = vpop.f32.mrb[0].mxu0
        %v809 = vadd.f32 %v708, %v808
        %v810 = vpop.f32.mrb[0].mxu0
        %v811 = vpop.f32.mrb[0].mxu0
        %v812 = vadd.f32 %v708, %v811
        %v813 = vpop.f32.mrb[0].mxu0
        %814 = vmatprep.mubr.bf16.mxu0 0
        %815 = vmatmul.mubr.bf16.gmra.mrb[0].mxu0 %v682
        %v816 = vpop.f32.mrb[0].mxu0
        %v817 = vadd.f32 %v708, %v816
        %v818 = vpop.f32.mrb[0].mxu0
        %v819 = vpop.f32.mrb[0].mxu0
        %v820 = vadd.f32 %v708, %v819
        %v821 = vpop.f32.mrb[0].mxu0
        %822 = vmatprep.mubr.bf16.mxu0 0
        %823 = vmatmul.mubr.bf16.gmra.mrb[0].mxu0 %v683
        %v824 = vpop.f32.mrb[0].mxu0
        %v825 = vadd.f32 %v708, %v824
        %v826 = vpop.f32.mrb[0].mxu0
        %v827 = vpop.f32.mrb[0].mxu0
        %v828 = vadd.f32 %v708, %v827
        %v829 = vpop.f32.mrb[0].mxu0
        %830 = vmatprep.mubr.bf16.mxu0 0
        %831 = vmatmul.mubr.bf16.gmra.mrb[0].mxu0 %v684
        %v832 = vpop.f32.mrb[0].mxu0
        %v833 = vadd.f32 %v708, %v832
        %v834 = vpop.f32.mrb[0].mxu0
        %v835 = vpop.f32.mrb[0].mxu0
        %v836 = vadd.f32 %v708, %v835
        %v837 = vpop.f32.mrb[0].mxu0
        %838 = vmatprep.mubr.bf16.mxu0 0
        %839 = vmatmul.mubr.bf16.gmra.mrb[0].mxu0 %v685
        %v840 = vpop.f32.mrb[0].mxu0
        %v841 = vadd.f32 %v708, %v840
        %v842 = vpop.f32.mrb[0].mxu0
        %v843 = vpop.f32.mrb[0].mxu0
        %v844 = vadd.f32 %v708, %v843
        %v845 = vpop.f32.mrb[0].mxu0
        %846 = vmatprep.mubr.bf16.mxu0 0
        %847 = vmatmul.mubr.bf16.gmra.mrb[0].mxu0 %v686
        %v848 = vpop.f32.mrb[0].mxu0
        %v849 = vadd.f32 %v708, %v848
        %v850 = vpop.f32.mrb[0].mxu0
        %v851 = vpop.f32.mrb[0].mxu0
        %v852 = vadd.f32 %v708, %v851
        %v853 = vpop.f32.mrb[0].mxu0
        %854 = vdwg.mxu0
        %855 = vst [vmem:[%s272] sm:$0xff] %v793
        %856 = vst [vmem:[%s272 + $0x8] sm:$0xff] %v796
        %857 = vst [vmem:[%s272 + $0x10] sm:$0xff] %v801
        %858 = vst [vmem:[%s272 + $0x18] sm:$0xff] %v804
        %859 = vst [vmem:[%s272 + $0x20] sm:$0xff] %v809
        %860 = vst [vmem:[%s272 + $0x28] sm:$0xff] %v812
        %861 = vst [vmem:[%s272 + $0x30] sm:$0xff] %v817
        %862 = vst [vmem:[%s272 + $0x38] sm:$0xff] %v820
        %863 = vst [vmem:[%s272 + $0x40] sm:$0xff] %v825
        %864 = vst [vmem:[%s272 + $0x48] sm:$0xff] %v828
        %865 = vst [vmem:[%s272 + $0x50] sm:$0xff] %v833
        %866 = vst [vmem:[%s272 + $0x58] sm:$0xff] %v836
        %867 = vst [vmem:[%s272 + $0x60] sm:$0xff] %v841
        %868 = vst [vmem:[%s272 + $0x68] sm:$0xff] %v844
        %869 = vst [vmem:[%s272 + $0x70] sm:$0xff] %v849
        %870 = vst [vmem:[%s272 + $0x78] sm:$0xff] %v852
        %s871 = sand.u32 %s181, 1
        %s872 = scalar_lea.sflag [#allocation3], %s871
        %s873 = sand.u32 %s181, 1
        %s874 = smul.addr %s873, 128
        %s875 = scalar_lea.vmem [#allocation2], %s874
        // Predicated region
        $region49: #{tpu_custom_call.1} parent=47 // pred_check
          %p876 = pneg %p191
        $region50: #{tpu_custom_call.1} parent=47 // pred_check_branch
          %878 = sbr.rel (%p876) target = $region52
        $region51: #{tpu_custom_call.1} parent=47 // pred_region
          %s879 = smul.u32 16, %s21
          %s881 = ssub.s32 2048, 2048
          %882 = vsyncadd %s872, %s881
          %s883 = smul.addr %s879, 128
          %s884 = scalar_lea.hbm %s7, %s883
          %s885 = sshll.u32 %s875, 4
          %s886 = int_to_ptr.vmem [resolvable:$true] %s885
          %891 = dma.vmem_to_hbm [thread:$0]  %s886, 2048, %s884, %s872, 128, 128, 8
        $region52: #{tpu_custom_call.1} parent=47 // pred_fallthru
          _
      $region48: #{tpu_custom_call.1} parent=5 // pred_fallthru
        _
      %p892 = scmp.le.s32.totalorder 2, %s16
      // Predicated region
      $region53: #{tpu_custom_call.1} parent=5 // pred_check
        %p893 = pneg %p892
      $region54: #{tpu_custom_call.1} parent=5 // pred_check_branch
        %895 = sbr.rel (%p893) target = $region56
      $region55: #{tpu_custom_call.1} parent=5 // pred_region
        %s896 = ssub.s32 %s16, 2
        // Predicated region
        $region57: #{tpu_custom_call.1} parent=55 // pred_check
          %p897 = pneg %p197
        $region58: #{tpu_custom_call.1} parent=55 // pred_check_branch
          %899 = sbr.rel (%p897) target = $region60
        $region59: #{tpu_custom_call.1} parent=55 // pred_region
          %s900 = sand.u32 %s182, 1
          %s901 = scalar_lea.sflag [#allocation3], %s900
          %s902 = sand.u32 %s182, 1
          %s903 = smul.addr %s902, 128
          %s904 = scalar_lea.vmem [#allocation2], %s903
          %905 = dma.done %s901, 2048
        $region60: #{tpu_custom_call.1} parent=55 // pred_fallthru
          _
      $region56: #{tpu_custom_call.1} parent=5 // pred_fallthru
        _
    $region6: #{tpu_custom_call.1} parent=1 // loop_footer
      %s20 = sadd.s32 1, %s16
    $region7: #{tpu_custom_call.1} parent=1 // loop_footer_branch
      %15 = sbr.rel target = $region3
    $region8: #{tpu_custom_call.1} parent=1 // loop_exit
      _
    %906 = vsyncpa [#allocation3], 1
    %s907 = scalar_lea.sflag [#allocation3], 1
    %908 = vsyncpa %s907, 1

</llo_original>
